<compile_context>
chip_gen: v5e
topology: v5e:2x2
jax: 0.10.0
libtpu: 0.0.40
codegen_flags: <defaults>
</compile_context>

<pallas_src>
import functools

import jax
import jax.numpy as jnp
from jax.experimental import pallas as pl
from jax.experimental.pallas import tpu as pltpu


def _preact_bn_conv_kernel(x_ref, scale_ref, shift_ref, w_ref, b_ref, o_ref,
                           *, th, kh):
    # x_ref:     (H_pad, W*Cin)        one image; rows on sublanes, (w,cin) on lanes
    # scale_ref: (1, W*Cin)            folded eval-mode BN scale (tiled over w)
    # shift_ref: (1, W*Cin)            folded eval-mode BN shift (tiled over w)
    # w_ref:     (KH, W*Cin, Wout*Cout) width-Toeplitz-expanded conv weights
    # b_ref:     (1, Wout*Cout)        conv bias (tiled over w_out)
    # o_ref:     (th, Wout*Cout)       lane-dense output rows for this h-tile
    hb = pl.program_id(1)
    row0 = hb * th

    acc = jnp.zeros(o_ref.shape, jnp.float32)
    for ki in range(kh):  # static unroll over the (small) kernel height
        # Shifted row window read straight from the Ref: an offset vld,
        # no XLU sublane shuffles and no big vreg-resident copy.
        rows = x_ref[pl.ds(row0 + ki, th), :]
        # BN (eval) + ReLU on the VPU; recomputed per ki (overlap is tiny and
        # avoids a scratch round-trip).
        y = jnp.maximum(rows * scale_ref[...] + shift_ref[...], 0.0)
        # One MXU matmul per ki: contraction = W*Cin, output = Wout*Cout lanes.
        acc = acc + jnp.dot(y, w_ref[ki], preferred_element_type=jnp.float32)

    o_ref[...] = (acc + b_ref[...]).astype(o_ref.dtype)


@functools.partial(jax.jit, static_argnames=("eps",))
def preact_bn_conv2d_forward(x, bn_gamma, bn_beta, bn_mean, bn_var,
                             conv_w, conv_b, *, eps=1e-5):
    """conv2d(relu(batchnorm2d(x))) — eval-mode BN, stride 1, VALID padding."""
    n, c_in, h, w = x.shape
    c_out, _, kh, kw = conv_w.shape
    h_out, w_out = h - kh + 1, w - kw + 1
    wc_in = w * c_in
    wc_out = w_out * c_out

    # h-tile: whole height for small images (full-extent block satisfies the
    # (8,128) rule for any value); otherwise a multiple of 8.
    th = h_out if h_out <= 64 else 64
    n_ht = pl.cdiv(h_out, th)
    h_pad = n_ht * th + kh - 1            # so every in-kernel slice is in-bounds

    # Fold eval-mode BatchNorm into per-channel scale/shift, broadcast over the
    # packed (w, cin) lane axis.
    scale_c = bn_gamma * jax.lax.rsqrt(bn_var + eps)        # (Cin,)
    shift_c = bn_beta - bn_mean * scale_c                   # (Cin,)
    scale = jnp.tile(scale_c, w).reshape(1, wc_in)
    shift = jnp.tile(shift_c, w).reshape(1, wc_in)

    # Single layout pass: NCHW -> (N, H, W*Cin); image rows on sublanes,
    # (w, cin) packed on the lane axis.
    xr = jnp.transpose(x, (0, 2, 3, 1)).reshape(n, h, wc_in)
    if h_pad > h:
        # Pad rows only feed output rows ho >= h_out, which land in the dropped
        # part of the last partial output block.
        xr = jnp.pad(xr, ((0, 0), (0, h_pad - h), (0, 0)))

    # Width-Toeplitz expansion of the conv weights (tiny, built once in XLA):
    #   T[ki, wi*Cin+ci, wo*Cout+co] = conv_w[co, ci, ki, wi-wo]  if 0<=wi-wo<kw
    w_k = jnp.transpose(conv_w, (2, 3, 1, 0))               # (kh, kw, cin, cout)
    dj = jnp.arange(w)[:, None] - jnp.arange(w_out)[None, :]  # (w, w_out)
    valid = (dj >= 0) & (dj < kw)
    g = w_k[:, jnp.clip(dj, 0, kw - 1), :, :]                # (kh, w, w_out, cin, cout)
    g = jnp.where(valid[None, :, :, None, None], g, 0.0)
    wt = jnp.transpose(g, (0, 1, 3, 2, 4)).reshape(kh, wc_in, wc_out)

    bias = jnp.tile(conv_b, w_out).reshape(1, wc_out)

    kernel = functools.partial(_preact_bn_conv_kernel, th=th, kh=kh)

    out = pl.pallas_call(
        kernel,
        out_shape=jax.ShapeDtypeStruct((n, h_out, wc_out), x.dtype),
        grid_spec=pltpu.PrefetchScalarGridSpec(
            num_scalar_prefetch=0,
            grid=(n, n_ht),
            in_specs=[
                # Whole (padded) image per batch element; same block index for
                # every h-tile -> DMA'd once, reused across the h grid axis.
                pl.BlockSpec((None, h_pad, wc_in), lambda i, j: (i, 0, 0)),
                pl.BlockSpec((1, wc_in), lambda i, j: (0, 0)),
                pl.BlockSpec((1, wc_in), lambda i, j: (0, 0)),
                pl.BlockSpec((kh, wc_in, wc_out), lambda i, j: (0, 0, 0)),
                pl.BlockSpec((1, wc_out), lambda i, j: (0, 0)),
            ],
            out_specs=pl.BlockSpec((None, th, wc_out), lambda i, j: (i, j, 0)),
        ),
        compiler_params=pltpu.CompilerParams(
            # Both axes independent -> megacore sharding on multi-TC chips;
            # per-step VMEM footprint here is well under the default scoped
            # limit on v5e/v6e/v7x, so no explicit vmem_limit_bytes needed.
            dimension_semantics=("parallel", "parallel"),
        ),
    )(xr, scale, shift, wt, bias)

    # (N, Hout, Wout*Cout) -> NCHW: contiguous reshape + one transpose
    # (required by the module's NCHW contract; keep NHWC across layers to
    # avoid it in a full network).
    return jnp.transpose(out.reshape(n, h_out, w_out, c_out), (0, 3, 1, 2))


class PreActBNConv2dPallas:
    """JAX/Pallas counterpart of the PyTorch PreActBNConv2d module
    (eval-mode BatchNorm2d -> ReLU -> Conv2d, stride 1, no padding)."""

    def __init__(self, in_channels, out_channels, kernel_size, *, key, eps=1e-5):
        k1, k2, k3, k4, k5, k6 = jax.random.split(key, 6)
        fan_in = in_channels * kernel_size * kernel_size
        bound = float(fan_in) ** -0.5
        self.conv_w = jax.random.uniform(
            k1, (out_channels, in_channels, kernel_size, kernel_size),
            jnp.float32, -bound, bound)
        self.conv_b = jax.random.uniform(k2, (out_channels,), jnp.float32,
                                         -bound, bound)
        self.bn_gamma = 1.0 + 0.1 * jax.random.normal(k3, (in_channels,), jnp.float32)
        self.bn_beta = 0.1 * jax.random.normal(k4, (in_channels,), jnp.float32)
        self.bn_mean = 0.1 * jax.random.normal(k5, (in_channels,), jnp.float32)
        self.bn_var = jax.random.uniform(k6, (in_channels,), jnp.float32, 0.5, 1.5)
        self.eps = eps

    def __call__(self, x):
        return preact_bn_conv2d_forward(
            x, self.bn_gamma, self.bn_beta, self.bn_mean, self.bn_var,
            self.conv_w, self.conv_b, eps=self.eps)


if __name__ == "__main__":
    key = jax.random.PRNGKey(0)
    k_param, k_x = jax.random.split(key)

    layer = PreActBNConv2dPallas(in_channels=4, out_channels=8, kernel_size=3,
                                 key=k_param)
    x = jax.random.normal(k_x, (2, 4, 16, 16), dtype=jnp.float32)

    y = layer(x)
    y = jax.block_until_ready(y)
    assert y.shape == (2, 8, 14, 14), y.shape

    # Pure-JAX reference with the same (eval-mode) semantics as PyTorch.
    inv_std = jax.lax.rsqrt(layer.bn_var + layer.eps)
    x_bn = ((x - layer.bn_mean[None, :, None, None])
            * inv_std[None, :, None, None]
            * layer.bn_gamma[None, :, None, None]
            + layer.bn_beta[None, :, None, None])
    x_act = jnp.maximum(x_bn, 0.0)
    y_ref = jax.lax.conv_general_dilated(
        x_act, layer.conv_w, window_strides=(1, 1), padding="VALID",
        dimension_numbers=("NCHW", "OIHW", "NCHW"),
        precision=jax.lax.Precision.HIGHEST,
    ) + layer.conv_b[None, :, None, None]

    # Tightened from 2e-2: the all-f32 kernel typically agrees to ~1e-5 with
    # the HIGHEST-precision reference; 5e-3 leaves margin for MXU f32-pass
    # rounding over the 36-term contraction while still catching layout bugs.
    err = float(jnp.max(jnp.abs(y - y_ref)))
    assert err < 5e-3, f"mismatch vs reference, max abs err = {err}"
    print("KERNEL_OK")
</pallas_src>

<mosaic_0001>
module attributes {stable_mosaic.version = 11 : i64} {
  func.func @_preact_bn_conv_kernel(%arg0: i32, %arg1: i32, %arg2: memref<1x16x64xf32, #tpu.memory_space<vmem>>, %arg3: memref<1x64xf32, #tpu.memory_space<vmem>>, %arg4: memref<1x64xf32, #tpu.memory_space<vmem>>, %arg5: memref<3x64x112xf32, #tpu.memory_space<vmem>>, %arg6: memref<1x112xf32, #tpu.memory_space<vmem>>, %arg7: memref<1x14x112xf32, #tpu.memory_space<vmem>>) attributes {dimension_semantics = [#tpu.dimension_semantics<parallel>, #tpu.dimension_semantics<parallel>], iteration_bounds = array<i64: 2, 1>, scalar_prefetch = 0 : i64, scratch_operands = 0 : i64, tpu.core_type = #tpu.core_type<tc>, window_params = [{transform_indices = @transform_0, window_bounds = array<i64: 1, 16, 64>}, {pipeline_mode = #tpu.pipeline_mode<synchronous>, transform_indices = @transform_1, window_bounds = array<i64: 1, 64>}, {pipeline_mode = #tpu.pipeline_mode<synchronous>, transform_indices = @transform_2, window_bounds = array<i64: 1, 64>}, {pipeline_mode = #tpu.pipeline_mode<synchronous>, transform_indices = @transform_3, window_bounds = array<i64: 3, 64, 112>}, {pipeline_mode = #tpu.pipeline_mode<synchronous>, transform_indices = @transform_4, window_bounds = array<i64: 1, 112>}, {transform_indices = @transform_5, window_bounds = array<i64: 1, 14, 112>}]} {
    %c14_i32 = arith.constant 14 : i32
    %0 = arith.muli %arg1, %c14_i32 : i32
    %cst = arith.constant 0.000000e+00 : f32
    %1 = vector.broadcast %cst : f32 to vector<14x112xf32>
    %c0_i32 = arith.constant 0 : i32
    %2 = arith.addi %0, %c0_i32 : i32
    %c0 = arith.constant 0 : index
    %3 = arith.index_cast %2 : i32 to index
    %c0_0 = arith.constant 0 : index
    %4 = vector.load %arg2[%c0, %3, %c0_0] : memref<1x16x64xf32, #tpu.memory_space<vmem>>, vector<1x14x64xf32>
    %5 = vector.shape_cast %4 : vector<1x14x64xf32> to vector<14x64xf32>
    %c0_1 = arith.constant 0 : index
    %c0_2 = arith.constant 0 : index
    %6 = vector.load %arg3[%c0_1, %c0_2] : memref<1x64xf32, #tpu.memory_space<vmem>>, vector<1x64xf32>
    %7 = vector.broadcast %6 : vector<1x64xf32> to vector<14x64xf32>
    %8 = arith.mulf %5, %7 : vector<14x64xf32>
    %c0_3 = arith.constant 0 : index
    %c0_4 = arith.constant 0 : index
    %9 = vector.load %arg4[%c0_3, %c0_4] : memref<1x64xf32, #tpu.memory_space<vmem>>, vector<1x64xf32>
    %10 = vector.broadcast %9 : vector<1x64xf32> to vector<14x64xf32>
    %11 = arith.addf %8, %10 : vector<14x64xf32>
    %cst_5 = arith.constant 0.000000e+00 : f32
    %12 = vector.broadcast %cst_5 : f32 to vector<14x64xf32>
    %13 = arith.maximumf %11, %12 : vector<14x64xf32>
    %c0_6 = arith.constant 0 : index
    %c0_7 = arith.constant 0 : index
    %c0_8 = arith.constant 0 : index
    %14 = vector.load %arg5[%c0_6, %c0_7, %c0_8] : memref<3x64x112xf32, #tpu.memory_space<vmem>>, vector<1x64x112xf32>
    %15 = vector.shape_cast %14 : vector<1x64x112xf32> to vector<64x112xf32>
    %cst_9 = arith.constant dense<0.000000e+00> : vector<14x112xf32>
    %16 = tpu.matmul %13, %15, %cst_9 {dimension_numbers = #tpu.dot_dimension_numbers<[1], [0], [0], [1], [0, 0, 1, 1], [], []>} : vector<14x64xf32>, vector<64x112xf32>, vector<14x112xf32> -> vector<14x112xf32>
    %17 = arith.addf %1, %16 : vector<14x112xf32>
    %c1_i32 = arith.constant 1 : i32
    %18 = arith.addi %0, %c1_i32 : i32
    %c0_10 = arith.constant 0 : index
    %19 = arith.index_cast %18 : i32 to index
    %c0_11 = arith.constant 0 : index
    %20 = vector.load %arg2[%c0_10, %19, %c0_11] : memref<1x16x64xf32, #tpu.memory_space<vmem>>, vector<1x14x64xf32>
    %21 = vector.shape_cast %20 : vector<1x14x64xf32> to vector<14x64xf32>
    %c0_12 = arith.constant 0 : index
    %c0_13 = arith.constant 0 : index
    %22 = vector.load %arg3[%c0_12, %c0_13] : memref<1x64xf32, #tpu.memory_space<vmem>>, vector<1x64xf32>
    %23 = vector.broadcast %22 : vector<1x64xf32> to vector<14x64xf32>
    %24 = arith.mulf %21, %23 : vector<14x64xf32>
    %c0_14 = arith.constant 0 : index
    %c0_15 = arith.constant 0 : index
    %25 = vector.load %arg4[%c0_14, %c0_15] : memref<1x64xf32, #tpu.memory_space<vmem>>, vector<1x64xf32>
    %26 = vector.broadcast %25 : vector<1x64xf32> to vector<14x64xf32>
    %27 = arith.addf %24, %26 : vector<14x64xf32>
    %cst_16 = arith.constant 0.000000e+00 : f32
    %28 = vector.broadcast %cst_16 : f32 to vector<14x64xf32>
    %29 = arith.maximumf %27, %28 : vector<14x64xf32>
    %c1 = arith.constant 1 : index
    %c0_17 = arith.constant 0 : index
    %c0_18 = arith.constant 0 : index
    %30 = vector.load %arg5[%c1, %c0_17, %c0_18] : memref<3x64x112xf32, #tpu.memory_space<vmem>>, vector<1x64x112xf32>
    %31 = vector.shape_cast %30 : vector<1x64x112xf32> to vector<64x112xf32>
    %cst_19 = arith.constant dense<0.000000e+00> : vector<14x112xf32>
    %32 = tpu.matmul %29, %31, %cst_19 {dimension_numbers = #tpu.dot_dimension_numbers<[1], [0], [0], [1], [0, 0, 1, 1], [], []>} : vector<14x64xf32>, vector<64x112xf32>, vector<14x112xf32> -> vector<14x112xf32>
    %33 = arith.addf %17, %32 : vector<14x112xf32>
    %c2_i32 = arith.constant 2 : i32
    %34 = arith.addi %0, %c2_i32 : i32
    %c0_20 = arith.constant 0 : index
    %35 = arith.index_cast %34 : i32 to index
    %c0_21 = arith.constant 0 : index
    %36 = vector.load %arg2[%c0_20, %35, %c0_21] : memref<1x16x64xf32, #tpu.memory_space<vmem>>, vector<1x14x64xf32>
    %37 = vector.shape_cast %36 : vector<1x14x64xf32> to vector<14x64xf32>
    %c0_22 = arith.constant 0 : index
    %c0_23 = arith.constant 0 : index
    %38 = vector.load %arg3[%c0_22, %c0_23] : memref<1x64xf32, #tpu.memory_space<vmem>>, vector<1x64xf32>
    %39 = vector.broadcast %38 : vector<1x64xf32> to vector<14x64xf32>
    %40 = arith.mulf %37, %39 : vector<14x64xf32>
    %c0_24 = arith.constant 0 : index
    %c0_25 = arith.constant 0 : index
    %41 = vector.load %arg4[%c0_24, %c0_25] : memref<1x64xf32, #tpu.memory_space<vmem>>, vector<1x64xf32>
    %42 = vector.broadcast %41 : vector<1x64xf32> to vector<14x64xf32>
    %43 = arith.addf %40, %42 : vector<14x64xf32>
    %cst_26 = arith.constant 0.000000e+00 : f32
    %44 = vector.broadcast %cst_26 : f32 to vector<14x64xf32>
    %45 = arith.maximumf %43, %44 : vector<14x64xf32>
    %c2 = arith.constant 2 : index
    %c0_27 = arith.constant 0 : index
    %c0_28 = arith.constant 0 : index
    %46 = vector.load %arg5[%c2, %c0_27, %c0_28] : memref<3x64x112xf32, #tpu.memory_space<vmem>>, vector<1x64x112xf32>
    %47 = vector.shape_cast %46 : vector<1x64x112xf32> to vector<64x112xf32>
    %cst_29 = arith.constant dense<0.000000e+00> : vector<14x112xf32>
    %48 = tpu.matmul %45, %47, %cst_29 {dimension_numbers = #tpu.dot_dimension_numbers<[1], [0], [0], [1], [0, 0, 1, 1], [], []>} : vector<14x64xf32>, vector<64x112xf32>, vector<14x112xf32> -> vector<14x112xf32>
    %49 = arith.addf %33, %48 : vector<14x112xf32>
    %c0_30 = arith.constant 0 : index
    %c0_31 = arith.constant 0 : index
    %50 = vector.load %arg6[%c0_30, %c0_31] : memref<1x112xf32, #tpu.memory_space<vmem>>, vector<1x112xf32>
    %51 = vector.broadcast %50 : vector<1x112xf32> to vector<14x112xf32>
    %52 = arith.addf %49, %51 : vector<14x112xf32>
    %c0_32 = arith.constant 0 : index
    %c0_33 = arith.constant 0 : index
    %c0_34 = arith.constant 0 : index
    %53 = vector.load %arg7[%c0_32, %c0_33, %c0_34] : memref<1x14x112xf32, #tpu.memory_space<vmem>>, vector<1x14x112xf32>
    %54 = vector.shape_cast %53 : vector<1x14x112xf32> to vector<14x112xf32>
    %55 = vector.shape_cast %52 : vector<14x112xf32> to vector<1x14x112xf32>
    tpu.vector_store %arg7[%c0_32, %c0_33, %c0_34], %55 {strides = array<i32>} : memref<1x14x112xf32, #tpu.memory_space<vmem>>, vector<1x14x112xf32>,
    return
  }
  func.func @transform_0(%arg0: i32, %arg1: i32) -> (i32, i32, i32) {
    %c0_i32 = arith.constant 0 : i32
    %c0_i32_0 = arith.constant 0 : i32
    %c0_i32_1 = arith.constant 0 : i32
    return %arg0, %c0_i32, %c0_i32_0 : i32, i32, i32
  }
  func.func @transform_1(%arg0: i32, %arg1: i32) -> (i32, i32) {
    %c0_i32 = arith.constant 0 : i32
    %c0_i32_0 = arith.constant 0 : i32
    %c0_i32_1 = arith.constant 0 : i32
    return %c0_i32, %c0_i32_0 : i32, i32
  }
  func.func @transform_2(%arg0: i32, %arg1: i32) -> (i32, i32) {
    %c0_i32 = arith.constant 0 : i32
    %c0_i32_0 = arith.constant 0 : i32
    %c0_i32_1 = arith.constant 0 : i32
    return %c0_i32, %c0_i32_0 : i32, i32
  }
  func.func @transform_3(%arg0: i32, %arg1: i32) -> (i32, i32, i32) {
    %c0_i32 = arith.constant 0 : i32
    %c0_i32_0 = arith.constant 0 : i32
    %c0_i32_1 = arith.constant 0 : i32
    %c0_i32_2 = arith.constant 0 : i32
    return %c0_i32, %c0_i32_0, %c0_i32_1 : i32, i32, i32
  }
  func.func @transform_4(%arg0: i32, %arg1: i32) -> (i32, i32) {
    %c0_i32 = arith.constant 0 : i32
    %c0_i32_0 = arith.constant 0 : i32
    %c0_i32_1 = arith.constant 0 : i32
    return %c0_i32, %c0_i32_0 : i32, i32
  }
  func.func @transform_5(%arg0: i32, %arg1: i32) -> (i32, i32, i32) {
    %c0_i32 = arith.constant 0 : i32
    %c0_i32_0 = arith.constant 0 : i32
    return %arg0, %arg1, %c0_i32 : i32, i32, i32
  }
}

</mosaic_0001>

<llo_original>
// kernel: tile.18
$region0: #{tile.18}
  #allocation0 [shape = 's32[1]{0}', space=sflag, size = 0x4, scoped, tag = 'scoped memory for tile.18']
  %s0 = inlined_call_operand.vmem [shape: f32[4], index: 0, kind: input, shape index: {}]
  %s1 = inlined_call_operand.vmem [shape: f32[16,4], index: 1, kind: output, shape index: {}]
  // Predicated region
  $region2: #{tile.18} parent=0 // pred_check
    _
  $region3: #{tile.18} parent=0 // pred_check_branch
    %3 = sbr.rel (0) target = $region5
  $region4: #{tile.18} parent=0 // pred_region
    _
  $region5: #{tile.18} parent=0 // pred_fallthru
    _
  %v4 = vld [vmem:[%s0] ss:$0 sm:$0xff]
  %5 = vst [vmem:[%s1] sm:$0xff] %v4
  %s6 = scalar_lea.vmem %s1, 8
  %7 = vst [vmem:[%s6] sm:$0xff] %v4

// kernel: tile.19
$region0: #{tile.19}
  %s0 = inlined_call_operand.vmem [shape: f32[16,4], index: 0, kind: input, shape index: {}]
  %s1 = inlined_call_operand.vmem [shape: f32[1,64], index: 1, kind: output, shape index: {}]
  $region1: #{tile.19} parent=0
    #allocation0 [shape = 'u8[4096]{0}', space=vmem, size = 0x1000, scoped, tag = 'scoped mem for output reshape']
    %v2 = vld [vmem:[%s0] sm:$0x1]
    %vm3 = vcmask 31744
    %4 = vst.msk [vmem:[#allocation0] sm:$0x1] %vm3, %v2
    %s5 = scalar_lea.vmem %s0, 15
    %v6 = vld [vmem:[%s5] sm:$0x1]
    %7 = vrot.lane.b32.xlu0 %v6, 60
    %v8 = vpop.permute.xlu0 %7
    %vm9 = vcmask 523744
    %10 = vst.msk [vmem:[#allocation0] sm:$0x1] %vm9, %v8
    %s11 = scalar_lea.vmem %s0, 14
    %v12 = vld [vmem:[%s11] sm:$0x1]
    %13 = vrot.lane.b32.xlu0 %v12, 56
    %v14 = vpop.permute.xlu0 %13
    %vm15 = vcmask 490944
    %16 = vst.msk [vmem:[#allocation0] sm:$0x1] %vm15, %v14
    %s17 = scalar_lea.vmem %s0, 13
    %v18 = vld [vmem:[%s17] sm:$0x1]
    %19 = vrot.lane.b32.xlu0 %v18, 52
    %v20 = vpop.permute.xlu0 %19
    %vm21 = vcmask 458144
    %22 = vst.msk [vmem:[#allocation0] sm:$0x1] %vm21, %v20
    %s23 = scalar_lea.vmem %s0, 12
    %v24 = vld [vmem:[%s23] sm:$0x1]
    %25 = vrot.lane.b32.xlu0 %v24, 48
    %v26 = vpop.permute.xlu0 %25
    %vm27 = vcmask 425344
    %28 = vst.msk [vmem:[#allocation0] sm:$0x1] %vm27, %v26
    %s29 = scalar_lea.vmem %s0, 11
    %v30 = vld [vmem:[%s29] sm:$0x1]
    %31 = vrot.lane.b32.xlu0 %v30, 44
    %v32 = vpop.permute.xlu0 %31
    %vm33 = vcmask 392544
    %34 = vst.msk [vmem:[#allocation0] sm:$0x1] %vm33, %v32
    %s35 = scalar_lea.vmem %s0, 10
    %v36 = vld [vmem:[%s35] sm:$0x1]
    %37 = vrot.lane.b32.xlu0 %v36, 40
    %v38 = vpop.permute.xlu0 %37
    %vm39 = vcmask 359744
    %40 = vst.msk [vmem:[#allocation0] sm:$0x1] %vm39, %v38
    %s41 = scalar_lea.vmem %s0, 9
    %v42 = vld [vmem:[%s41] sm:$0x1]
    %43 = vrot.lane.b32.xlu0 %v42, 36
    %v44 = vpop.permute.xlu0 %43
    %vm45 = vcmask 326944
    %46 = vst.msk [vmem:[#allocation0] sm:$0x1] %vm45, %v44
    %s47 = scalar_lea.vmem %s0, 8
    %v48 = vld [vmem:[%s47] sm:$0x1]
    %49 = vrot.lane.b32.xlu0 %v48, 32
    %v50 = vpop.permute.xlu0 %49
    %vm51 = vcmask 294144
    %52 = vst.msk [vmem:[#allocation0] sm:$0x1] %vm51, %v50
    %s53 = scalar_lea.vmem %s0, 7
    %v54 = vld [vmem:[%s53] sm:$0x1]
    %55 = vrot.lane.b32.xlu0 %v54, 28
    %v56 = vpop.permute.xlu0 %55
    %vm57 = vcmask 261344
    %58 = vst.msk [vmem:[#allocation0] sm:$0x1] %vm57, %v56
    %s59 = scalar_lea.vmem %s0, 6
    %v60 = vld [vmem:[%s59] sm:$0x1]
    %61 = vrot.lane.b32.xlu0 %v60, 24
    %v62 = vpop.permute.xlu0 %61
    %vm63 = vcmask 228544
    %64 = vst.msk [vmem:[#allocation0] sm:$0x1] %vm63, %v62
    %s65 = scalar_lea.vmem %s0, 5
    %v66 = vld [vmem:[%s65] sm:$0x1]
    %67 = vrot.lane.b32.xlu0 %v66, 20
    %v68 = vpop.permute.xlu0 %67
    %vm69 = vcmask 195744
    %70 = vst.msk [vmem:[#allocation0] sm:$0x1] %vm69, %v68
    %s71 = scalar_lea.vmem %s0, 4
    %v72 = vld [vmem:[%s71] sm:$0x1]
    %73 = vrot.lane.b32.xlu0 %v72, 16
    %v74 = vpop.permute.xlu0 %73
    %vm75 = vcmask 162944
    %76 = vst.msk [vmem:[#allocation0] sm:$0x1] %vm75, %v74
    %s77 = scalar_lea.vmem %s0, 3
    %v78 = vld [vmem:[%s77] sm:$0x1]
    %79 = vrot.lane.b32.xlu0 %v78, 12
    %v80 = vpop.permute.xlu0 %79
    %vm81 = vcmask 130144
    %82 = vst.msk [vmem:[#allocation0] sm:$0x1] %vm81, %v80
    %s83 = scalar_lea.vmem %s0, 2
    %v84 = vld [vmem:[%s83] sm:$0x1]
    %85 = vrot.lane.b32.xlu0 %v84, 8
    %v86 = vpop.permute.xlu0 %85
    %vm87 = vcmask 97344
    %88 = vst.msk [vmem:[#allocation0] sm:$0x1] %vm87, %v86
    %s89 = scalar_lea.vmem %s0, 1
    %v90 = vld [vmem:[%s89] sm:$0x1]
    %91 = vrot.lane.b32.xlu0 %v90, 4
    %v92 = vpop.permute.xlu0 %91
    %vm93 = vcmask 64544
    %94 = vst.msk [vmem:[#allocation0] sm:$0x1] %vm93, %v92
    %s96 = ssub.s32 2, 1
    %v97 = vld [vmem:[#allocation0] sm:%s96]
    %s99 = ssub.s32 2, 1
    %100 = vst [vmem:[%s1] sm:%s99] %v97

// kernel: tile.28
$region0: #{tile.28}
  #allocation0 [shape = 's32[1]{0}', space=sflag, size = 0x4, scoped, tag = 'scoped memory for tile.28']
  %s0 = inlined_call_operand.vmem [shape: f32[8], index: 0, kind: input, shape index: {}]
  %s1 = inlined_call_operand.vmem [shape: f32[14,8], index: 1, kind: output, shape index: {}]
  // Predicated region
  $region2: #{tile.28} parent=0 // pred_check
    _
  $region3: #{tile.28} parent=0 // pred_check_branch
    %3 = sbr.rel (0) target = $region5
  $region4: #{tile.28} parent=0 // pred_region
    _
  $region5: #{tile.28} parent=0 // pred_fallthru
    _
  %v4 = vld [vmem:[%s0] ss:$0 sm:$0xff]
  %5 = vst [vmem:[%s1] sm:$0xff] %v4
  %s6 = scalar_lea.vmem %s1, 8
  %7 = vst [vmem:[%s6] sm:$0xff] %v4

// kernel: tile.29
$region0: #{tile.29}
  %s0 = inlined_call_operand.vmem [shape: f32[14,8], index: 0, kind: input, shape index: {}]
  %s1 = inlined_call_operand.vmem [shape: f32[1,112], index: 1, kind: output, shape index: {}]
  $region1: #{tile.29} parent=0
    #allocation0 [shape = 'u8[4096]{0}', space=vmem, size = 0x1000, scoped, tag = 'scoped mem for output reshape']
    %v2 = vld [vmem:[%s0] sm:$0x1]
    %vm3 = vcmask 64512
    %4 = vst.msk [vmem:[#allocation0] sm:$0x1] %vm3, %v2
    %s5 = scalar_lea.vmem %s0, 13
    %v6 = vld [vmem:[%s5] sm:$0x1]
    %7 = vrot.lane.b32.xlu0 %v6, 104
    %v8 = vpop.permute.xlu0 %7
    %vm9 = vcmask 917312
    %10 = vst.msk [vmem:[#allocation0] sm:$0x1] %vm9, %v8
    %s11 = scalar_lea.vmem %s0, 12
    %v12 = vld [vmem:[%s11] sm:$0x1]
    %13 = vrot.lane.b32.xlu0 %v12, 96
    %v14 = vpop.permute.xlu0 %13
    %vm15 = vcmask 851712
    %16 = vst.msk [vmem:[#allocation0] sm:$0x1] %vm15, %v14
    %s17 = scalar_lea.vmem %s0, 11
    %v18 = vld [vmem:[%s17] sm:$0x1]
    %19 = vrot.lane.b32.xlu0 %v18, 88
    %v20 = vpop.permute.xlu0 %19
    %vm21 = vcmask 786112
    %22 = vst.msk [vmem:[#allocation0] sm:$0x1] %vm21, %v20
    %s23 = scalar_lea.vmem %s0, 10
    %v24 = vld [vmem:[%s23] sm:$0x1]
    %25 = vrot.lane.b32.xlu0 %v24, 80
    %v26 = vpop.permute.xlu0 %25
    %vm27 = vcmask 720512
    %28 = vst.msk [vmem:[#allocation0] sm:$0x1] %vm27, %v26
    %s29 = scalar_lea.vmem %s0, 9
    %v30 = vld [vmem:[%s29] sm:$0x1]
    %31 = vrot.lane.b32.xlu0 %v30, 72
    %v32 = vpop.permute.xlu0 %31
    %vm33 = vcmask 654912
    %34 = vst.msk [vmem:[#allocation0] sm:$0x1] %vm33, %v32
    %s35 = scalar_lea.vmem %s0, 8
    %v36 = vld [vmem:[%s35] sm:$0x1]
    %37 = vrot.lane.b32.xlu0 %v36, 64
    %v38 = vpop.permute.xlu0 %37
    %vm39 = vcmask 589312
    %40 = vst.msk [vmem:[#allocation0] sm:$0x1] %vm39, %v38
    %s41 = scalar_lea.vmem %s0, 7
    %v42 = vld [vmem:[%s41] sm:$0x1]
    %43 = vrot.lane.b32.xlu0 %v42, 56
    %v44 = vpop.permute.xlu0 %43
    %vm45 = vcmask 523712
    %46 = vst.msk [vmem:[#allocation0] sm:$0x1] %vm45, %v44
    %s47 = scalar_lea.vmem %s0, 6
    %v48 = vld [vmem:[%s47] sm:$0x1]
    %49 = vrot.lane.b32.xlu0 %v48, 48
    %v50 = vpop.permute.xlu0 %49
    %vm51 = vcmask 458112
    %52 = vst.msk [vmem:[#allocation0] sm:$0x1] %vm51, %v50
    %s53 = scalar_lea.vmem %s0, 5
    %v54 = vld [vmem:[%s53] sm:$0x1]
    %55 = vrot.lane.b32.xlu0 %v54, 40
    %v56 = vpop.permute.xlu0 %55
    %vm57 = vcmask 392512
    %58 = vst.msk [vmem:[#allocation0] sm:$0x1] %vm57, %v56
    %s59 = scalar_lea.vmem %s0, 4
    %v60 = vld [vmem:[%s59] sm:$0x1]
    %61 = vrot.lane.b32.xlu0 %v60, 32
    %v62 = vpop.permute.xlu0 %61
    %vm63 = vcmask 326912
    %64 = vst.msk [vmem:[#allocation0] sm:$0x1] %vm63, %v62
    %s65 = scalar_lea.vmem %s0, 3
    %v66 = vld [vmem:[%s65] sm:$0x1]
    %67 = vrot.lane.b32.xlu0 %v66, 24
    %v68 = vpop.permute.xlu0 %67
    %vm69 = vcmask 261312
    %70 = vst.msk [vmem:[#allocation0] sm:$0x1] %vm69, %v68
    %s71 = scalar_lea.vmem %s0, 2
    %v72 = vld [vmem:[%s71] sm:$0x1]
    %73 = vrot.lane.b32.xlu0 %v72, 16
    %v74 = vpop.permute.xlu0 %73
    %vm75 = vcmask 195712
    %76 = vst.msk [vmem:[#allocation0] sm:$0x1] %vm75, %v74
    %s77 = scalar_lea.vmem %s0, 1
    %v78 = vld [vmem:[%s77] sm:$0x1]
    %79 = vrot.lane.b32.xlu0 %v78, 8
    %v80 = vpop.permute.xlu0 %79
    %vm81 = vcmask 130112
    %82 = vst.msk [vmem:[#allocation0] sm:$0x1] %vm81, %v80
    %s84 = ssub.s32 2, 1
    %v85 = vld [vmem:[#allocation0] sm:%s84]
    %s87 = ssub.s32 2, 1
    %88 = vst [vmem:[%s1] sm:%s87] %v85

// kernel: preact_bn_conv2d_forward.1
$region0: #{preact_bn_conv2d_forward.1}
  #allocation0 [shape = 'u32[]', space=smem, size = 0x4, offset = 0x4, fixed_abs, tag = 'smem constant byte address 0x4 - core index']
  #allocation1 [shape = 'u32[72,128]{1,0:T(1,128)}', space=vmem, size = 0x9000, scoped, tag = 'internal scratch']
  %s0 = inlined_call_operand.vmem [shape: f32[2,16,64], index: 0, kind: input, shape index: {}]
  %s1 = inlined_call_operand.vmem [shape: f32[1,64], index: 1, kind: input, shape index: {}]
  %s2 = inlined_call_operand.vmem [shape: f32[1,64], index: 2, kind: input, shape index: {}]
  %s3 = inlined_call_operand.vmem [shape: f32[3,64,112], index: 3, kind: input, shape index: {}]
  %s4 = inlined_call_operand.vmem [shape: f32[1,112], index: 4, kind: input, shape index: {}]
  %s5 = inlined_call_operand.vmem [shape: f32[2,14,112], index: 5, kind: output, shape index: {}]
  %s6 = sld [smem:[#allocation0]]
  $region53: #{preact_bn_conv2d_forward.1} parent=0
    _
  %s8 = ssub.s32 1, %s6
  %s9 = scalar_select 0, %s8, %s6
  loop: start=0, step=1, limit=4
  $region2: #{preact_bn_conv2d_forward.1} parent=0 // loop_pre_header
    _
  $region3: #{preact_bn_conv2d_forward.1} parent=0 // loop_header
    %s11 = sphi 0, %s15
    %p12 = scmp.ge.s32.totalorder %s11, 4
    %s18 = sphi 0, %s30
    %s19 = sphi 0, %s26
    %s20 = sphi 0, %s18
    %s21 = sphi 0, %s19
    %s22 = sphi 0, %s20
    %s23 = sphi 0, %s21
    %s33 = sphi 0, %s35
    %s36 = sphi 0, %s33
    %s37 = sphi 0, %s36
    %s53 = sphi 0, %s37
    %s57 = sphi 0, %s57
    %s59 = sphi 0, %s57
    %s60 = sphi 0, %s59
    %s74 = sphi 0, %s60
    %s78 = sphi 0, %s78
    %s80 = sphi 0, %s78
    %s81 = sphi 0, %s80
    %s95 = sphi 0, %s81
    %s99 = sphi 0, %s99
    %s101 = sphi 0, %s99
    %s102 = sphi 0, %s101
    %s116 = sphi 0, %s102
    %s120 = sphi 0, %s120
    %s122 = sphi 0, %s120
    %s123 = sphi 0, %s122
    %s137 = sphi 0, %s123
    %s145 = sphi 0, %s147
    %s148 = sphi 0, %s145
    %s149 = sphi 0, %s148
    %s165 = sphi 0, %s149
  $region4: #{preact_bn_conv2d_forward.1} parent=0 // loop_header_branch
    %14 = sbr.rel (%p12) target = $region8
  $region5: #{preact_bn_conv2d_forward.1} parent=0 // loop_body
    %s16 = ssub.s32 %s11, 1
    %s17 = ssub.s32 %s11, 2
    %s24 = sadd.s32 1, %s19
    %p25 = scmp.ge.s32.totalorder %s24, 1
    %s26 = scalar_select %p25, 0, %s24
    %s27 = sadd.s32 1, %s18
    %s28 = scalar_select %p25, %s27, %s18
    %p29 = scmp.ge.s32.totalorder %s28, 2
    %s30 = scalar_select %p29, 0, %s28
    %s31 = ssub.s32 %s18, %s30
    %p32 = scmp.eq.s32.totalorder %s31, 0
    %s34 = sadd.s32 %s33, 1
    %s35 = scalar_select %p32, %s33, %s34
    %p38 = pneg %p32
    %p39 = scmp.eq.s32.totalorder %s11, 1
    %p40 = por %p38, %p39
    %p41 = scmp.ne.s32.totalorder %s33, %s36
    %p42 = scmp.eq.s32.totalorder %s11, 0
    %p43 = por %p41, %p42
    %p44 = scmp.ne.s32.totalorder %s33, %s36
    %p45 = scmp.eq.s32.totalorder %s16, 1
    %p46 = por %p44, %p45
    %p47 = scmp.ne.s32.totalorder %s36, %s37
    %p48 = scmp.eq.s32.totalorder %s16, 0
    %p49 = por %p47, %p48
    %p50 = scmp.ne.s32.totalorder %s36, %s37
    %p51 = scmp.eq.s32.totalorder %s17, 1
    %p52 = por %p50, %p51
    %p54 = scmp.ne.s32.totalorder %s37, %s53
    %p55 = scmp.eq.s32.totalorder %s17, 0
    %p56 = por %p54, %p55
    %s58 = sadd.s32 %s57, 1
    %p61 = scmp.eq.s32.totalorder %s11, 1
    %p62 = scmp.ne.s32.totalorder %s57, %s59
    %p63 = scmp.eq.s32.totalorder %s11, 0
    %p64 = por %p62, %p63
    %p65 = scmp.ne.s32.totalorder %s57, %s59
    %p66 = scmp.eq.s32.totalorder %s16, 1
    %p67 = por %p65, %p66
    %p68 = scmp.ne.s32.totalorder %s59, %s60
    %p69 = scmp.eq.s32.totalorder %s16, 0
    %p70 = por %p68, %p69
    %p71 = scmp.ne.s32.totalorder %s59, %s60
    %p72 = scmp.eq.s32.totalorder %s17, 1
    %p73 = por %p71, %p72
    %p75 = scmp.ne.s32.totalorder %s60, %s74
    %p76 = scmp.eq.s32.totalorder %s17, 0
    %p77 = por %p75, %p76
    %s79 = sadd.s32 %s78, 1
    %p82 = scmp.eq.s32.totalorder %s11, 1
    %p83 = scmp.ne.s32.totalorder %s78, %s80
    %p84 = scmp.eq.s32.totalorder %s11, 0
    %p85 = por %p83, %p84
    %p86 = scmp.ne.s32.totalorder %s78, %s80
    %p87 = scmp.eq.s32.totalorder %s16, 1
    %p88 = por %p86, %p87
    %p89 = scmp.ne.s32.totalorder %s80, %s81
    %p90 = scmp.eq.s32.totalorder %s16, 0
    %p91 = por %p89, %p90
    %p92 = scmp.ne.s32.totalorder %s80, %s81
    %p93 = scmp.eq.s32.totalorder %s17, 1
    %p94 = por %p92, %p93
    %p96 = scmp.ne.s32.totalorder %s81, %s95
    %p97 = scmp.eq.s32.totalorder %s17, 0
    %p98 = por %p96, %p97
    %s100 = sadd.s32 %s99, 1
    %p103 = scmp.eq.s32.totalorder %s11, 1
    %p104 = scmp.ne.s32.totalorder %s99, %s101
    %p105 = scmp.eq.s32.totalorder %s11, 0
    %p106 = por %p104, %p105
    %p107 = scmp.ne.s32.totalorder %s99, %s101
    %p108 = scmp.eq.s32.totalorder %s16, 1
    %p109 = por %p107, %p108
    %p110 = scmp.ne.s32.totalorder %s101, %s102
    %p111 = scmp.eq.s32.totalorder %s16, 0
    %p112 = por %p110, %p111
    %p113 = scmp.ne.s32.totalorder %s101, %s102
    %p114 = scmp.eq.s32.totalorder %s17, 1
    %p115 = por %p113, %p114
    %p117 = scmp.ne.s32.totalorder %s102, %s116
    %p118 = scmp.eq.s32.totalorder %s17, 0
    %p119 = por %p117, %p118
    %s121 = sadd.s32 %s120, 1
    %p124 = scmp.eq.s32.totalorder %s11, 1
    %p125 = scmp.ne.s32.totalorder %s120, %s122
    %p126 = scmp.eq.s32.totalorder %s11, 0
    %p127 = por %p125, %p126
    %p128 = scmp.ne.s32.totalorder %s120, %s122
    %p129 = scmp.eq.s32.totalorder %s16, 1
    %p130 = por %p128, %p129
    %p131 = scmp.ne.s32.totalorder %s122, %s123
    %p132 = scmp.eq.s32.totalorder %s16, 0
    %p133 = por %p131, %p132
    %p134 = scmp.ne.s32.totalorder %s122, %s123
    %p135 = scmp.eq.s32.totalorder %s17, 1
    %p136 = por %p134, %p135
    %p138 = scmp.ne.s32.totalorder %s123, %s137
    %p139 = scmp.eq.s32.totalorder %s17, 0
    %p140 = por %p138, %p139
    %s141 = ssub.s32 %s18, %s30
    %s142 = ssub.s32 %s19, %s26
    %s143 = sor.u32 %s141, %s142
    %p144 = scmp.eq.s32.totalorder %s143, 0
    %s146 = sadd.s32 %s145, 1
    %s147 = scalar_select %p144, %s145, %s146
    %p150 = pneg %p144
    %p151 = scmp.eq.s32.totalorder %s11, 1
    %p152 = por %p150, %p151
    %p153 = scmp.ne.s32.totalorder %s145, %s148
    %p154 = scmp.eq.s32.totalorder %s11, 0
    %p155 = por %p153, %p154
    %p156 = scmp.ne.s32.totalorder %s145, %s148
    %p157 = scmp.eq.s32.totalorder %s16, 1
    %p158 = por %p156, %p157
    %p159 = scmp.ne.s32.totalorder %s148, %s149
    %p160 = scmp.eq.s32.totalorder %s16, 0
    %p161 = por %p159, %p160
    %p162 = scmp.ne.s32.totalorder %s148, %s149
    %p163 = scmp.eq.s32.totalorder %s17, 1
    %p164 = por %p162, %p163
    %p166 = scmp.ne.s32.totalorder %s149, %s165
    %p167 = scmp.eq.s32.totalorder %s17, 0
    %p168 = por %p166, %p167
    %p169 = scmp.le.s32.totalorder 1, %s11
    %p170 = scmp.lt.s32.totalorder %s11, 3
    %p171 = pnand %p169, %p170
    %p172 = pneg %p171
    // Predicated region
    $region9: #{preact_bn_conv2d_forward.1} parent=5 // pred_check
      _
    $region10: #{preact_bn_conv2d_forward.1} parent=5 // pred_check_branch
      %174 = sbr.rel (%p171) target = $region12
    $region11: #{preact_bn_conv2d_forward.1} parent=5 // pred_region
      %s175 = ssub.s32 %s11, 1
      // Predicated region
      $region13: #{preact_bn_conv2d_forward.1} parent=11 // pred_check
        %p176 = pneg %p70
      $region14: #{preact_bn_conv2d_forward.1} parent=11 // pred_check_branch
        %178 = sbr.rel (%p176) target = $region16
      $region15: #{preact_bn_conv2d_forward.1} parent=11 // pred_region
        _
      $region16: #{preact_bn_conv2d_forward.1} parent=11 // pred_fallthru
        _
      // Predicated region
      $region17: #{preact_bn_conv2d_forward.1} parent=11 // pred_check
        %p179 = pneg %p91
      $region18: #{preact_bn_conv2d_forward.1} parent=11 // pred_check_branch
        %181 = sbr.rel (%p179) target = $region20
      $region19: #{preact_bn_conv2d_forward.1} parent=11 // pred_region
        _
      $region20: #{preact_bn_conv2d_forward.1} parent=11 // pred_fallthru
        _
      // Predicated region
      $region21: #{preact_bn_conv2d_forward.1} parent=11 // pred_check
        %p182 = pneg %p112
      $region22: #{preact_bn_conv2d_forward.1} parent=11 // pred_check_branch
        %184 = sbr.rel (%p182) target = $region24
      $region23: #{preact_bn_conv2d_forward.1} parent=11 // pred_region
        _
      $region24: #{preact_bn_conv2d_forward.1} parent=11 // pred_fallthru
        _
      // Predicated region
      $region25: #{preact_bn_conv2d_forward.1} parent=11 // pred_check
        %p185 = pneg %p133
      $region26: #{preact_bn_conv2d_forward.1} parent=11 // pred_check_branch
        %187 = sbr.rel (%p185) target = $region28
      $region27: #{preact_bn_conv2d_forward.1} parent=11 // pred_region
        _
      $region28: #{preact_bn_conv2d_forward.1} parent=11 // pred_fallthru
        _
    $region12: #{preact_bn_conv2d_forward.1} parent=5 // pred_fallthru
      _
    %p188 = scmp.lt.s32.totalorder %s11, 2
    // Predicated region
    $region29: #{preact_bn_conv2d_forward.1} parent=5 // pred_check
      %p189 = pneg %p188
    $region30: #{preact_bn_conv2d_forward.1} parent=5 // pred_check_branch
      %191 = sbr.rel (%p189) target = $region32
    $region31: #{preact_bn_conv2d_forward.1} parent=5 // pred_region
      // Predicated region
      $region33: #{preact_bn_conv2d_forward.1} parent=31 // pred_check
        %p192 = pneg %p43
      $region34: #{preact_bn_conv2d_forward.1} parent=31 // pred_check_branch
        %194 = sbr.rel (%p192) target = $region36
      $region35: #{preact_bn_conv2d_forward.1} parent=31 // pred_region
        %p195 = scmp.lt.s32.totalorder %s18, 1
        %s196 = scalar_select %p195, %s18, 1
        %s197 = smul.addr %s196, 2
        %s198 = smul.addr %s197, 8
        %s199 = scalar_lea.vmem %s0, %s198
      $region36: #{preact_bn_conv2d_forward.1} parent=31 // pred_fallthru
        _
    $region32: #{preact_bn_conv2d_forward.1} parent=5 // pred_fallthru
      _
    %p200 = scmp.le.s32.totalorder 1, %s11
    %p201 = scmp.lt.s32.totalorder %s11, 3
    %p202 = pnand %p200, %p201
    %p203 = pneg %p202
    // Predicated region
    $region37: #{preact_bn_conv2d_forward.1} parent=5 // pred_check
      _
    $region38: #{preact_bn_conv2d_forward.1} parent=5 // pred_check_branch
      %205 = sbr.rel (%p202) target = $region40
    $region39: #{preact_bn_conv2d_forward.1} parent=5 // pred_region
      %s206 = ssub.s32 %s11, 1
      %p207 = scmp.lt.s32.totalorder %s20, 1
      %s208 = scalar_select %p207, %s20, 1
      %s209 = smul.addr %s208, 2
      %s210 = smul.addr %s209, 8
      %s211 = scalar_lea.vmem %s0, %s210
      %p212 = pneg %p49
      %p213 = pneg %p46
      %p214 = pneg %p70
      %p215 = pneg %p67
      %p216 = pneg %p91
      %p217 = pneg %p88
      %p218 = pneg %p112
      %p219 = pneg %p109
      %p220 = pneg %p133
      %p221 = pneg %p130
      %p222 = pneg %p161
      %p223 = pneg %p158
      %s224 = smul.u32 2, %s21
      %p225 = scmp.lt.s32.totalorder %s20, 1
      %s226 = scalar_select %p225, %s20, 1
      %p227 = scmp.lt.s32.totalorder %s224, 1
      %s228 = scalar_select %p227, %s224, 1
      %s229 = smul.addr %s226, 2
      %s230 = sadd.s32 %s228, %s229
      %s231 = smul.addr %s230, 8
      %s232 = scalar_lea.vmem %s5, %s231
      %p233 = scmp.lt.s32.totalorder %s20, 1
      %s234 = scalar_select %p233, %s20, 1
      %s235 = smul.addr %s234, 2
      %s236 = smul.addr %s235, 8
      %s237 = scalar_lea.vmem %s0, %s236
      %s238 = smul.u32 2, %s21
      %p239 = scmp.lt.s32.totalorder %s20, 1
      %s240 = scalar_select %p239, %s20, 1
      %p241 = scmp.lt.s32.totalorder %s238, 1
      %s242 = scalar_select %p241, %s238, 1
      %s243 = smul.addr %s240, 2
      %s244 = sadd.s32 %s242, %s243
      %s245 = smul.addr %s244, 8
      %s246 = scalar_lea.vmem %s5, %s245
      %s247 = smul.u32 2, %s21
      %s248 = smul.u32 %s21, 14
      %s249 = scalar_lea.vmem %s237, %s248
      %v250 = vld [vmem:[%s249] sm:$0xff]
      %v251 = vld [vmem:[%s249 + $0x8] sm:$0x3f]
      %v252 = vld [vmem:[%s1] sm:$0x1]
      %v254 = vperm.slane %v252, 0
      %v256 = vmul.f32 %v250, %v254
      %v257 = vmul.f32 %v251, %v254
      %v258 = vld [vmem:[%s2] sm:$0x1]
      %v260 = vperm.slane %v258, 0
      %v262 = vadd.f32 %v256, %v260
      %v263 = vadd.f32 %v257, %v260
      %v264 = vmax.f32 %v262, 0.0
      %v265 = vmax.f32 %v263, 0.0
      %v266 = vld [vmem:[%s3] sm:$0xff]
      %v267 = vld [vmem:[%s3 + $0x8] sm:$0xff]
      %v268 = vld [vmem:[%s3 + $0x10] sm:$0xff]
      %v269 = vld [vmem:[%s3 + $0x18] sm:$0xff]
      %v270 = vld [vmem:[%s3 + $0x20] sm:$0xff]
      %v271 = vld [vmem:[%s3 + $0x28] sm:$0xff]
      %v272 = vld [vmem:[%s3 + $0x30] sm:$0xff]
      %v273 = vld [vmem:[%s3 + $0x38] sm:$0xff]
      %s274 = sadd.s32 %s248, 1
      %s275 = scalar_lea.vmem %s237, %s274
      %v276 = vld [vmem:[%s275] sm:$0xff]
      %v277 = vld [vmem:[%s275 + $0x8] sm:$0x3f]
      %v278 = vmul.f32 %v276, %v254
      %v279 = vmul.f32 %v277, %v254
      %v280 = vadd.f32 %v278, %v260
      %v281 = vadd.f32 %v279, %v260
      %v282 = vmax.f32 %v280, 0.0
      %v283 = vmax.f32 %v281, 0.0
      %s284 = scalar_lea.vmem %s3, 64
      %v285 = vld [vmem:[%s284] sm:$0xff]
      %v286 = vld [vmem:[%s284 + $0x8] sm:$0xff]
      %v287 = vld [vmem:[%s284 + $0x10] sm:$0xff]
      %v288 = vld [vmem:[%s284 + $0x18] sm:$0xff]
      %v289 = vld [vmem:[%s284 + $0x20] sm:$0xff]
      %v290 = vld [vmem:[%s284 + $0x28] sm:$0xff]
      %v291 = vld [vmem:[%s284 + $0x30] sm:$0xff]
      %v292 = vld [vmem:[%s284 + $0x38] sm:$0xff]
      %vm293 = vcmask 523264
      %v295 = vsel %vm293, %v282, 0
      %v298 = vsel %vm293, %v283, 0
      %300 = vmatpush.msra.mxu0 0.0
      %301 = vmatpush.msra.mxu0 0.0
      %302 = vmatpush.msra.mxu0 0.0
      %303 = vmatpush.msra.mxu0 0.0
      %304 = vmatpush.msra.mxu0 0.0
      %305 = vmatpush.msra.mxu0 0.0
      %306 = vmatpush.msra.mxu0 0.0
      %307 = vmatpush.msra.mxu0 0.0
      %308 = vmatpush.msra.mxu0 %v292
      %309 = vmatpush.msra.mxu0 %v291
      %310 = vmatpush.msra.mxu0 %v290
      %311 = vmatpush.msra.mxu0 %v289
      %312 = vmatpush.msra.mxu0 %v288
      %313 = vmatpush.msra.mxu0 %v287
      %314 = vmatpush.msra.mxu0 %v286
      %315 = vmatpush.msra.mxu0 %v285
      %316 = vmatmul.f32.gmra.mxu0 %v295
      %v317 = vpop.f32.mrf.mxu0
      %v318 = vadd.f32 0.0, %v317
      %319 = vmatmul.f32.gmra.mxu0 %v298
      %v320 = vpop.f32.mrf.mxu0
      %v321 = vadd.f32 0.0, %v320
      %322 = vdwg.mxu0
      %v324 = vsel %vm293, %v264, 0
      %v327 = vsel %vm293, %v265, 0
      %329 = vmatpush.msra.mxu0 0.0
      %330 = vmatpush.msra.mxu0 0.0
      %331 = vmatpush.msra.mxu0 0.0
      %332 = vmatpush.msra.mxu0 0.0
      %333 = vmatpush.msra.mxu0 0.0
      %334 = vmatpush.msra.mxu0 0.0
      %335 = vmatpush.msra.mxu0 0.0
      %336 = vmatpush.msra.mxu0 0.0
      %337 = vmatpush.msra.mxu0 %v273
      %338 = vmatpush.msra.mxu0 %v272
      %339 = vmatpush.msra.mxu0 %v271
      %340 = vmatpush.msra.mxu0 %v270
      %341 = vmatpush.msra.mxu0 %v269
      %342 = vmatpush.msra.mxu0 %v268
      %343 = vmatpush.msra.mxu0 %v267
      %344 = vmatpush.msra.mxu0 %v266
      %345 = vmatmul.f32.gmra.mxu0 %v324
      %v346 = vpop.f32.mrf.mxu0
      %v347 = vadd.f32 %v318, %v346
      %348 = vmatmul.f32.gmra.mxu0 %v327
      %v349 = vpop.f32.mrf.mxu0
      %v350 = vadd.f32 %v321, %v349
      %351 = vdwg.mxu0
      %s352 = sadd.s32 %s248, 2
      %s353 = scalar_lea.vmem %s237, %s352
      %v354 = vld [vmem:[%s353] sm:$0xff]
      %v355 = vld [vmem:[%s353 + $0x8] sm:$0x3f]
      %v356 = vmul.f32 %v354, %v254
      %v357 = vmul.f32 %v355, %v254
      %v358 = vadd.f32 %v356, %v260
      %v359 = vadd.f32 %v357, %v260
      %v360 = vmax.f32 %v358, 0.0
      %v361 = vmax.f32 %v359, 0.0
      %s362 = scalar_lea.vmem %s3, 128
      %v363 = vld [vmem:[%s362] sm:$0xff]
      %v364 = vld [vmem:[%s362 + $0x8] sm:$0xff]
      %v365 = vld [vmem:[%s362 + $0x10] sm:$0xff]
      %v366 = vld [vmem:[%s362 + $0x18] sm:$0xff]
      %v367 = vld [vmem:[%s362 + $0x20] sm:$0xff]
      %v368 = vld [vmem:[%s362 + $0x28] sm:$0xff]
      %v369 = vld [vmem:[%s362 + $0x30] sm:$0xff]
      %v370 = vld [vmem:[%s362 + $0x38] sm:$0xff]
      %v372 = vsel %vm293, %v360, 0
      %v375 = vsel %vm293, %v361, 0
      %377 = vmatpush.msra.mxu0 0.0
      %378 = vmatpush.msra.mxu0 0.0
      %379 = vmatpush.msra.mxu0 0.0
      %380 = vmatpush.msra.mxu0 0.0
      %381 = vmatpush.msra.mxu0 0.0
      %382 = vmatpush.msra.mxu0 0.0
      %383 = vmatpush.msra.mxu0 0.0
      %384 = vmatpush.msra.mxu0 0.0
      %385 = vmatpush.msra.mxu0 %v370
      %386 = vmatpush.msra.mxu0 %v369
      %387 = vmatpush.msra.mxu0 %v368
      %388 = vmatpush.msra.mxu0 %v367
      %389 = vmatpush.msra.mxu0 %v366
      %390 = vmatpush.msra.mxu0 %v365
      %391 = vmatpush.msra.mxu0 %v364
      %392 = vmatpush.msra.mxu0 %v363
      %393 = vmatmul.f32.gmra.mxu0 %v372
      %v394 = vpop.f32.mrf.mxu0
      %v395 = vadd.f32 0.0, %v394
      %396 = vmatmul.f32.gmra.mxu0 %v375
      %v397 = vpop.f32.mrf.mxu0
      %v398 = vadd.f32 0.0, %v397
      %399 = vdwg.mxu0
      %v400 = vadd.f32 %v347, %v395
      %v401 = vadd.f32 %v350, %v398
      %v402 = vld [vmem:[%s4] sm:$0x1]
      %v404 = vperm.slane %v402, 0
      %v406 = vadd.f32 %v400, %v404
      %v407 = vadd.f32 %v401, %v404
      %vm408 = vcmask 916480
      %409 = vst.msk [vmem:[%s246] sm:$0xff] %vm408, %v406
      %vm410 = vcmask 914432
      %411 = vst.msk [vmem:[%s246 + $0x8] sm:$0x3f] %vm410, %v407
      %s412 = smul.u32 2, %s21
      %p413 = scmp.lt.s32.totalorder %s20, 1
      %s414 = scalar_select %p413, %s20, 1
      %p415 = scmp.lt.s32.totalorder %s412, 1
      %s416 = scalar_select %p415, %s412, 1
      %s417 = smul.addr %s414, 2
      %s418 = sadd.s32 %s416, %s417
      %s419 = smul.addr %s418, 8
      %s420 = scalar_lea.vmem %s5, %s419
      // Predicated region
      $region41: #{preact_bn_conv2d_forward.1} parent=39 // pred_check
        %p421 = pneg %p158
      $region42: #{preact_bn_conv2d_forward.1} parent=39 // pred_check_branch
        %423 = sbr.rel (%p421) target = $region44
      $region43: #{preact_bn_conv2d_forward.1} parent=39 // pred_region
        %s424 = smul.u32 2, %s21
      $region44: #{preact_bn_conv2d_forward.1} parent=39 // pred_fallthru
        _
    $region40: #{preact_bn_conv2d_forward.1} parent=5 // pred_fallthru
      _
    %p425 = scmp.le.s32.totalorder 2, %s11
    // Predicated region
    $region45: #{preact_bn_conv2d_forward.1} parent=5 // pred_check
      %p426 = pneg %p425
    $region46: #{preact_bn_conv2d_forward.1} parent=5 // pred_check_branch
      %428 = sbr.rel (%p426) target = $region48
    $region47: #{preact_bn_conv2d_forward.1} parent=5 // pred_region
      %s429 = ssub.s32 %s11, 2
      // Predicated region
      $region49: #{preact_bn_conv2d_forward.1} parent=47 // pred_check
        %p430 = pneg %p164
      $region50: #{preact_bn_conv2d_forward.1} parent=47 // pred_check_branch
        %432 = sbr.rel (%p430) target = $region52
      $region51: #{preact_bn_conv2d_forward.1} parent=47 // pred_region
        %s433 = smul.u32 2, %s23
        %p434 = scmp.lt.s32.totalorder %s22, 1
        %s435 = scalar_select %p434, %s22, 1
        %p436 = scmp.lt.s32.totalorder %s433, 1
        %s437 = scalar_select %p436, %s433, 1
        %s438 = smul.addr %s435, 2
        %s439 = sadd.s32 %s437, %s438
        %s440 = smul.addr %s439, 8
        %s441 = scalar_lea.vmem %s5, %s440
      $region52: #{preact_bn_conv2d_forward.1} parent=47 // pred_fallthru
        _
    $region48: #{preact_bn_conv2d_forward.1} parent=5 // pred_fallthru
      _
  $region6: #{preact_bn_conv2d_forward.1} parent=0 // loop_footer
    %s15 = sadd.s32 1, %s11
  $region7: #{preact_bn_conv2d_forward.1} parent=0 // loop_footer_branch
    %10 = sbr.rel target = $region3
  $region8: #{preact_bn_conv2d_forward.1} parent=0 // loop_exit
    _

</llo_original>
